<compile_context>
chip_gen: v6e
topology: v6e:2x2x1
jax: 0.10.0
libtpu: 0.0.40
codegen_flags: <defaults>
</compile_context>

<pallas_src>
import functools
import itertools

import numpy as np
import jax
import jax.numpy as jnp
from jax import lax
from jax.experimental import pallas as pl
from jax.experimental.pallas import tpu as pltpu

# Matching cost weights (args.set_cost_idx / args.set_cost_act in __init__).
COST_IDX = 10.0   # cost_hbox == cost_obox
COST_ACT = 1.0    # cost_action

LANE = 128        # TPU lane width; pad the pair dim to a multiple of this


# ----------------------------- Pallas kernel -----------------------------

def pair_cost_kernel(hidx_ref, oidx_ref, act_ref, rhs_ref, c_ref, *,
                     bs, Q, valid_ids):
    """Single grid step: whole batch.

    hidx_ref, oidx_ref : (bs*Q, K)   index-prediction logits
    act_ref            : (bs*Q, A)   action logits (last col = no-interaction)
    rhs_ref            : (bs, 2K+A-1, P_pad)  host-folded cost matrix (see above)
    c_ref              : (bs, Q, P_pad)       output cost matrix (lane-padded)
    """

    def softmax_last(x):
        m = jnp.max(x, axis=-1, keepdims=True)
        e = jnp.exp(x - m)
        return e * pl.reciprocal(jnp.sum(e, axis=-1, keepdims=True), approx=True)

    def sigmoid(x):
        return pl.reciprocal(1.0 + jnp.exp(-x), approx=True)

    hprob = softmax_last(hidx_ref[...])              # (bs*Q, K)
    oprob = softmax_last(oidx_ref[...])              # (bs*Q, K)

    # out_act[..., valid_ids] = 0 on the *logits* (as in the PyTorch module),
    # via a static lane-iota mask — no extra DMA'd operand.
    act = act_ref[...]                               # (bs*Q, A)
    if valid_ids:
        col = lax.broadcasted_iota(jnp.int32, act.shape, dimension=1)
        is_valid = functools.reduce(
            jnp.logical_or, [col == v for v in valid_ids])
        act = jnp.where(is_valid, 0.0, act)
    s = sigmoid(act)
    out_act = s[:, :-1] * (1.0 - s[:, -1:])          # (bs*Q, A-1)

    # Fused LHS: [hprob | oprob | out_act]  -> one matmul per batch element.
    lhs_all = jnp.concatenate([hprob, oprob, out_act], axis=-1)   # (bs*Q, 2K+A-1)

    for b in range(bs):                               # tiny static unroll
        lhs = lhs_all[b * Q:(b + 1) * Q]              # (Q, 2K+A-1), sublane-aligned
        c_ref[b] = jnp.dot(lhs, rhs_ref[b],
                           preferred_element_type=jnp.float32)     # (Q, P_pad)


def pair_matching_cost(pred_hidx, pred_oidx, pred_actions, combined_rhs,
                       valid_ids, p_pad):
    """Returns the lane-padded cost matrix (bs, Q, p_pad); slice [:, :, :P]."""
    bs, Q, K = pred_hidx.shape
    A = pred_actions.shape[-1]
    F = combined_rhs.shape[1]                         # 2K + A - 1

    hidx2 = pred_hidx.reshape(bs * Q, K)
    oidx2 = pred_oidx.reshape(bs * Q, K)
    act2 = pred_actions.reshape(bs * Q, A)

    kernel = functools.partial(pair_cost_kernel, bs=bs, Q=Q,
                               valid_ids=tuple(int(v) for v in valid_ids))

    return pl.pallas_call(
        kernel,
        out_shape=jax.ShapeDtypeStruct((bs, Q, p_pad), jnp.float32),
        grid_spec=pltpu.PrefetchScalarGridSpec(
            num_scalar_prefetch=0,
            grid=(1,),                                # whole batch in one step
            in_specs=[
                pl.BlockSpec((bs * Q, K), lambda i: (0, 0)),        # pred_hidx
                pl.BlockSpec((bs * Q, K), lambda i: (0, 0)),        # pred_oidx
                pl.BlockSpec((bs * Q, A), lambda i: (0, 0)),        # pred_actions
                pl.BlockSpec((bs, F, p_pad), lambda i: (0, 0, 0)),  # folded RHS
            ],
            out_specs=pl.BlockSpec((bs, Q, p_pad), lambda i: (0, 0, 0)),
        ),
        compiler_params=pltpu.CompilerParams(
            dimension_semantics=("arbitrary",)),
    )(hidx2, oidx2, act2, combined_rhs)


# -------------------- host-side glue (data dependent) --------------------

def cdist_l1(a, b):
    return np.abs(a[:, None, :] - b[None, :, :]).sum(-1)


def reduce_redundant_gt_box(tgt_bbox, indices):
    tgt_bbox_unique, map_idx = np.unique(tgt_bbox, axis=0, return_inverse=True)
    k_idx, bbox_idx = indices
    if len(tgt_bbox) != len(tgt_bbox_unique):
        map_dict = {k: v for k, v in enumerate(map_idx)}
        map_bbox2kidx = {int(b): k for b, k in zip(bbox_idx, k_idx)}
        bbox_lst, k_lst = [], []
        for bid in bbox_idx:
            if map_dict[int(bid)] not in bbox_lst:
                bbox_lst.append(map_dict[int(bid)])
                k_lst.append(map_bbox2kidx[int(bid)])
        bbox_idx = np.asarray(bbox_lst)
        k_idx = np.asarray(k_lst)
        tgt_bbox_res = tgt_bbox_unique
    else:
        tgt_bbox_res = tgt_bbox
    return tgt_bbox_res, np.asarray(k_idx), np.asarray(bbox_idx)


def process_target(target, indices, invalid_ids):
    """Replicates the per-batch target munging of HungarianPairMatcher.forward.
    (torch.unique / nonzero / dict bookkeeping — no Pallas equivalent)."""
    pair_actions = np.array(target['pair_actions'], dtype=np.float32)
    pair_actions[:, invalid_ids] = 0
    keep = pair_actions.sum(-1) != 0
    pair_boxes = target['pair_boxes'][keep]
    pair_actions = pair_actions[keep]
    pair_targets = target['pair_targets'][keep]

    tgt_bbox = target['boxes']
    tgt_cls = target['labels']
    tgt_hbox = pair_boxes[:, :4]
    tgt_obox = pair_boxes[:, 4:]
    hbox_with_ones = np.concatenate(
        [tgt_hbox, np.ones((tgt_hbox.shape[0], 1), np.float32)], axis=1)
    obox_with_ones = np.concatenate([tgt_obox, pair_targets[:, None]], axis=1)
    obox_with_ones[obox_with_ones[:, :4].sum(1) == -4, -1] = -1
    bbox_with_cls = np.concatenate(
        [tgt_bbox, tgt_cls[:, None].astype(np.float32)], axis=1)
    bbox_with_cls, k_idx, bbox_idx = reduce_redundant_gt_box(bbox_with_cls, indices)
    bbox_with_cls = np.concatenate(
        [bbox_with_cls, np.full((1, 5), -1.0, np.float32)], axis=0)

    cost_hbox = cdist_l1(hbox_with_ones, bbox_with_cls)
    cost_obox = cdist_l1(obox_with_ones, bbox_with_cls)
    h_match = np.argwhere(cost_hbox == 0)
    o_match = np.argwhere(cost_obox == 0)
    assert len(h_match) == len(o_match)

    tgt_hids, tgt_oids = [], []
    for (_, Hb), (_, Ob) in zip(h_match, o_match):
        if Ob == len(bbox_with_cls) - 1:
            Ob = Hb
        tgt_hids.append(k_idx[np.nonzero(bbox_idx == Hb)[0]])
        tgt_oids.append(k_idx[np.nonzero(bbox_idx == Ob)[0]])
    if len(tgt_hids) == 0:
        tgt_hids.append(np.array([-1]))
    if len(tgt_oids) == 0:
        tgt_oids.append(np.array([-1]))
    tgt_hids = np.concatenate(tgt_hids).astype(np.int64)
    tgt_oids = np.concatenate(tgt_oids).astype(np.int64)

    tgt_act = pair_actions
    tgt_sum = tgt_act.sum(-1)[None, :]
    if tgt_act.shape[0] == 0:
        tgt_act = np.zeros((1, pair_actions.shape[1]), np.float32)
        tgt_sum = (tgt_act.sum(-1) + 1)[None, :]
    neg_act = (~tgt_act.astype(bool)).astype(np.float32)
    neg_sum = neg_act.sum(-1)[None, :]
    return tgt_hids, tgt_oids, tgt_act, neg_act, tgt_sum.astype(np.float32), neg_sum


def one_hot(ids, k):
    ids = np.asarray(ids, dtype=np.int64)
    ids = np.where(ids < 0, ids + k, ids)   # negative index -> gather last col
    oh = np.zeros((len(ids), k), np.float32)
    oh[np.arange(len(ids)), ids] = 1.0
    return oh


def build_combined_rhs(per_batch, K, p_pad):
    """Fold one-hot gathers, cost weights, signs and denominators into a single
    (2K + A-1, p_pad) matrix per batch element (zero-padded along the pair dim)."""
    mats, pair_counts = [], []
    for (hids, oids, tgt_act, neg_act, tgt_sum, neg_sum) in per_batch:
        P = tgt_act.shape[0]
        h_scaled = (-COST_IDX) * one_hot(hids, K).T                       # (K, P)
        o_scaled = (-COST_IDX) * one_hot(oids, K).T                       # (K, P)
        # NOTE: denominators are used as-is to match the original module
        # (it divides by tgt_sum / neg_sum without a guard).
        a_comb = COST_ACT * (neg_act.T / neg_sum - tgt_act.T / tgt_sum)   # (A-1, P)
        rhs = np.concatenate([h_scaled, o_scaled, a_comb], axis=0).astype(np.float32)
        rhs_pad = np.zeros((rhs.shape[0], p_pad), np.float32)
        rhs_pad[:, :P] = rhs
        mats.append(rhs_pad)
        pair_counts.append(P)
    return np.stack(mats), pair_counts


def linear_sum_assignment_bruteforce(C):
    """Exact optimal assignment for small cost matrices (host side)."""
    # TODO(synk): scipy.optimize.linear_sum_assignment (Hungarian) has no Pallas
    # equivalent; exact brute force is used here for small problem sizes.
    n_rows, n_cols = C.shape
    best, best_cost = None, np.inf
    for perm in itertools.permutations(range(n_rows), n_cols):
        cost = sum(C[perm[j], j] for j in range(n_cols))
        if cost < best_cost:
            best_cost, best = cost, perm
    rows = np.asarray(best, dtype=np.int64)
    cols = np.arange(n_cols, dtype=np.int64)
    order = np.argsort(rows)
    return rows[order], cols[order]


def reference_cost(hidx, oidx, act, valid_ids, tgt_hids, tgt_oids,
                   tgt_act, neg_act, tgt_sum, neg_sum):
    """Plain-numpy reference of the original (un-folded) cost formula."""
    def softmax(x):
        e = np.exp(x - x.max(-1, keepdims=True))
        return e / e.sum(-1, keepdims=True)
    hprob = softmax(hidx)
    oprob = softmax(oidx)
    a = act.copy()
    a[..., valid_ids] = 0
    s = 1.0 / (1.0 + np.exp(-a))
    out_act = s[:, :-1] * (1.0 - s[:, -1:])
    cost_h = -hprob[:, tgt_hids]
    cost_o = -oprob[:, tgt_oids]
    cost_pos = -(out_act @ tgt_act.T) / tgt_sum
    cost_neg = (out_act @ neg_act.T) / neg_sum
    return COST_IDX * cost_h + COST_IDX * cost_o + COST_ACT * (cost_pos + cost_neg)


# --------------------------------- main ----------------------------------

if __name__ == "__main__":
    bs, Q, num_obj_q = 2, 16, 8
    K = num_obj_q + 1          # pred_hidx / pred_oidx last dim
    A = 9                      # pred_actions last dim (num_actions + "no-interaction")
    valid_ids = [0, 2]         # zeroed in the prediction logits (as in the module)
    invalid_ids = [5]          # zeroed in GT pair_actions

    key = jax.random.PRNGKey(0)
    k1, k2, k3 = jax.random.split(key, 3)
    pred_hidx = jax.random.normal(k1, (bs, Q, K), jnp.float32)
    pred_oidx = jax.random.normal(k2, (bs, Q, K), jnp.float32)
    pred_actions = jax.random.normal(k3, (bs, Q, A), jnp.float32)

    # synthetic GT targets: humans carry class label 1 (required for hbox match)
    def build_target(b):
        rng = np.random.default_rng(100 + b)
        boxes = rng.uniform(0.1, 0.9, size=(4, 4)).astype(np.float32)
        labels = np.array([1.0, 1.0, 3.0, 5.0], dtype=np.float32)
        pair_boxes = np.stack([
            np.concatenate([boxes[0], boxes[2]]),
            np.concatenate([boxes[1], boxes[3]]),
            np.concatenate([boxes[0], -np.ones(4, np.float32)]),   # object-less pair
            np.concatenate([boxes[1], boxes[2]]),
        ]).astype(np.float32)
        pair_targets = np.array([3.0, 5.0, 0.0, 3.0], dtype=np.float32)
        pair_actions = np.array([
            [1, 0, 0, 0, 0, 0, 0, 0],
            [0, 1, 1, 0, 0, 0, 0, 0],
            [0, 0, 0, 1, 0, 0, 0, 0],
            [1, 0, 0, 0, 0, 0, 1, 0]], dtype=np.float32)
        return {'boxes': boxes, 'labels': labels, 'pair_boxes': pair_boxes,
                'pair_actions': pair_actions, 'pair_targets': pair_targets}

    targets = [build_target(b) for b in range(bs)]
    # detection-matcher indices (k_idx = object-query id, bbox_idx = GT box id)
    indices = [(np.array([2, 5, 0, 7]), np.array([0, 1, 2, 3])),
               (np.array([1, 3, 6, 4]), np.array([0, 1, 2, 3]))]

    # host-side target processing -> folded, fixed-size kernel operand
    per_batch = [process_target(targets[b], indices[b], invalid_ids) for b in range(bs)]
    max_pairs = max(pb[2].shape[0] for pb in per_batch)
    P_pad = ((max_pairs + LANE - 1) // LANE) * LANE            # lane-dense output
    combined_rhs, pair_counts = build_combined_rhs(per_batch, K, P_pad)  # (bs, 2K+A-1, P_pad)

    C_pad = pair_matching_cost(
        pred_hidx, pred_oidx, pred_actions,
        jnp.asarray(combined_rhs), valid_ids, P_pad)
    C_pad = jax.block_until_ready(C_pad)
    C_pad_np = np.asarray(C_pad)                               # (bs, Q, P_pad)

    # numerical check vs plain-numpy reference of the original math
    hidx_np = np.asarray(pred_hidx)
    oidx_np = np.asarray(pred_oidx)
    act_np = np.asarray(pred_actions)
    C_per_batch = []
    for b in range(bs):
        hids, oids, ta, na, ts, ns = per_batch[b]
        P_b = pair_counts[b]
        C_b = C_pad_np[b, :, :P_b]
        C_per_batch.append(C_b)
        ref = reference_cost(hidx_np[b], oidx_np[b], act_np[b], valid_ids,
                             hids, oids, ta, na, ts, ns)
        assert np.allclose(C_b, ref, atol=5e-3, rtol=5e-3), \
            f"mismatch at batch {b}: {np.abs(C_b - ref).max()}"

    # final assignment + target updates (host side, like the original module)
    return_list = []
    for b in range(bs):
        row, col = linear_sum_assignment_bruteforce(C_per_batch[b])
        return_list.append((row, col))
        targets[b]['h_labels'] = per_batch[b][0]
        targets[b]['o_labels'] = per_batch[b][1]

    print("KERNEL_OK")
</pallas_src>

<mosaic_0001>
module attributes {stable_mosaic.version = 11 : i64} {
  func.func @pair_cost_kernel(%arg0: i32, %arg1: memref<32x9xf32, #tpu.memory_space<vmem>>, %arg2: memref<32x9xf32, #tpu.memory_space<vmem>>, %arg3: memref<32x9xf32, #tpu.memory_space<vmem>>, %arg4: memref<2x26x128xf32, #tpu.memory_space<vmem>>, %arg5: memref<2x16x128xf32, #tpu.memory_space<vmem>>) attributes {dimension_semantics = [#tpu.dimension_semantics<arbitrary>], iteration_bounds = array<i64: 1>, scalar_prefetch = 0 : i64, scratch_operands = 0 : i64, tpu.core_type = #tpu.core_type<tc>, window_params = [{pipeline_mode = #tpu.pipeline_mode<synchronous>, transform_indices = @transform_0, window_bounds = array<i64: 32, 9>}, {pipeline_mode = #tpu.pipeline_mode<synchronous>, transform_indices = @transform_1, window_bounds = array<i64: 32, 9>}, {pipeline_mode = #tpu.pipeline_mode<synchronous>, transform_indices = @transform_2, window_bounds = array<i64: 32, 9>}, {pipeline_mode = #tpu.pipeline_mode<synchronous>, transform_indices = @transform_3, window_bounds = array<i64: 2, 26, 128>}, {pipeline_mode = #tpu.pipeline_mode<synchronous>, transform_indices = @transform_4, window_bounds = array<i64: 2, 16, 128>}]} {
    %c0 = arith.constant 0 : index
    %c0_0 = arith.constant 0 : index
    %0 = vector.load %arg1[%c0, %c0_0] : memref<32x9xf32, #tpu.memory_space<vmem>>, vector<32x9xf32>
    %cst = arith.constant dense<0xFF800000> : vector<32xf32>
    %1 = vector.multi_reduction <maximumf>, %0, %cst [1] : vector<32x9xf32> to vector<32xf32>
    %2 = vector.shape_cast %1 : vector<32xf32> to vector<32x1xf32>
    %3 = vector.broadcast %2 : vector<32x1xf32> to vector<32x9xf32>
    %4 = arith.subf %0, %3 : vector<32x9xf32>
    %5 = math.exp %4 : vector<32x9xf32>
    %cst_1 = arith.constant dense<0.000000e+00> : vector<32xf32>
    %6 = vector.multi_reduction <add>, %5, %cst_1 [1] : vector<32x9xf32> to vector<32xf32>
    %7 = vector.shape_cast %6 : vector<32xf32> to vector<32x1xf32>
    %8 = tpu.reciprocal %7 {approx = true} : vector<32x1xf32> -> vector<32x1xf32>
    %9 = vector.broadcast %8 : vector<32x1xf32> to vector<32x9xf32>
    %10 = arith.mulf %5, %9 : vector<32x9xf32>
    %c0_2 = arith.constant 0 : index
    %c0_3 = arith.constant 0 : index
    %11 = vector.load %arg2[%c0_2, %c0_3] : memref<32x9xf32, #tpu.memory_space<vmem>>, vector<32x9xf32>
    %cst_4 = arith.constant dense<0xFF800000> : vector<32xf32>
    %12 = vector.multi_reduction <maximumf>, %11, %cst_4 [1] : vector<32x9xf32> to vector<32xf32>
    %13 = vector.shape_cast %12 : vector<32xf32> to vector<32x1xf32>
    %14 = vector.broadcast %13 : vector<32x1xf32> to vector<32x9xf32>
    %15 = arith.subf %11, %14 : vector<32x9xf32>
    %16 = math.exp %15 : vector<32x9xf32>
    %cst_5 = arith.constant dense<0.000000e+00> : vector<32xf32>
    %17 = vector.multi_reduction <add>, %16, %cst_5 [1] : vector<32x9xf32> to vector<32xf32>
    %18 = vector.shape_cast %17 : vector<32xf32> to vector<32x1xf32>
    %19 = tpu.reciprocal %18 {approx = true} : vector<32x1xf32> -> vector<32x1xf32>
    %20 = vector.broadcast %19 : vector<32x1xf32> to vector<32x9xf32>
    %21 = arith.mulf %16, %20 : vector<32x9xf32>
    %c0_6 = arith.constant 0 : index
    %c0_7 = arith.constant 0 : index
    %22 = vector.load %arg3[%c0_6, %c0_7] : memref<32x9xf32, #tpu.memory_space<vmem>>, vector<32x9xf32>
    %23 = tpu.iota {dimensions = array<i32: 1>} : vector<32x9xi32>
    %c0_i32 = arith.constant 0 : i32
    %24 = vector.broadcast %c0_i32 : i32 to vector<32x9xi32>
    %25 = arith.cmpi eq, %23, %24 : vector<32x9xi32>
    %c2_i32 = arith.constant 2 : i32
    %26 = vector.broadcast %c2_i32 : i32 to vector<32x9xi32>
    %27 = arith.cmpi eq, %23, %26 : vector<32x9xi32>
    %28 = arith.ori %25, %27 : vector<32x9xi1>
    %cst_8 = arith.constant 0.000000e+00 : f32
    %29 = vector.broadcast %cst_8 : f32 to vector<32x9xf32>
    %30 = arith.select %28, %29, %22 : vector<32x9xi1>, vector<32x9xf32>
    %cst_9 = arith.constant 0.000000e+00 : f32
    %31 = vector.broadcast %cst_9 : f32 to vector<32x9xf32>
    %32 = arith.subf %31, %30 : vector<32x9xf32>
    %33 = math.exp %32 : vector<32x9xf32>
    %cst_10 = arith.constant 1.000000e+00 : f32
    %34 = vector.broadcast %cst_10 : f32 to vector<32x9xf32>
    %35 = arith.addf %34, %33 : vector<32x9xf32>
    %36 = tpu.reciprocal %35 {approx = true} : vector<32x9xf32> -> vector<32x9xf32>
    %37 = vector.extract_strided_slice %36 {offsets = [0, 0], sizes = [32, 8], strides = [1, 1]} : vector<32x9xf32> to vector<32x8xf32>
    %38 = vector.extract_strided_slice %36 {offsets = [0, 8], sizes = [32, 1], strides = [1, 1]} : vector<32x9xf32> to vector<32x1xf32>
    %cst_11 = arith.constant 1.000000e+00 : f32
    %39 = vector.broadcast %cst_11 : f32 to vector<32x1xf32>
    %40 = arith.subf %39, %38 : vector<32x1xf32>
    %41 = vector.broadcast %40 : vector<32x1xf32> to vector<32x8xf32>
    %42 = arith.mulf %37, %41 : vector<32x8xf32>
    %43 = tpu.concatenate %10, %21, %42 in 1 : vector<32x9xf32>, vector<32x9xf32>, vector<32x8xf32> -> vector<32x26xf32>
    %44 = vector.extract_strided_slice %43 {offsets = [0, 0], sizes = [16, 26], strides = [1, 1]} : vector<32x26xf32> to vector<16x26xf32>
    %c0_12 = arith.constant 0 : index
    %c0_13 = arith.constant 0 : index
    %c0_14 = arith.constant 0 : index
    %45 = vector.load %arg4[%c0_12, %c0_13, %c0_14] : memref<2x26x128xf32, #tpu.memory_space<vmem>>, vector<1x26x128xf32>
    %46 = vector.shape_cast %45 : vector<1x26x128xf32> to vector<26x128xf32>
    %cst_15 = arith.constant dense<0.000000e+00> : vector<16x128xf32>
    %47 = tpu.matmul %44, %46, %cst_15 {dimension_numbers = #tpu.dot_dimension_numbers<[1], [0], [0], [1], [0, 0, 1, 1], [], []>} : vector<16x26xf32>, vector<26x128xf32>, vector<16x128xf32> -> vector<16x128xf32>
    %c0_16 = arith.constant 0 : index
    %c0_17 = arith.constant 0 : index
    %c0_18 = arith.constant 0 : index
    %48 = vector.load %arg5[%c0_16, %c0_17, %c0_18] : memref<2x16x128xf32, #tpu.memory_space<vmem>>, vector<1x16x128xf32>
    %49 = vector.shape_cast %48 : vector<1x16x128xf32> to vector<16x128xf32>
    %50 = vector.shape_cast %47 : vector<16x128xf32> to vector<1x16x128xf32>
    tpu.vector_store %arg5[%c0_16, %c0_17, %c0_18], %50 {strides = array<i32>} : memref<2x16x128xf32, #tpu.memory_space<vmem>>, vector<1x16x128xf32>,
    %51 = vector.extract_strided_slice %43 {offsets = [16, 0], sizes = [16, 26], strides = [1, 1]} : vector<32x26xf32> to vector<16x26xf32>
    %c1 = arith.constant 1 : index
    %c0_19 = arith.constant 0 : index
    %c0_20 = arith.constant 0 : index
    %52 = vector.load %arg4[%c1, %c0_19, %c0_20] : memref<2x26x128xf32, #tpu.memory_space<vmem>>, vector<1x26x128xf32>
    %53 = vector.shape_cast %52 : vector<1x26x128xf32> to vector<26x128xf32>
    %cst_21 = arith.constant dense<0.000000e+00> : vector<16x128xf32>
    %54 = tpu.matmul %51, %53, %cst_21 {dimension_numbers = #tpu.dot_dimension_numbers<[1], [0], [0], [1], [0, 0, 1, 1], [], []>} : vector<16x26xf32>, vector<26x128xf32>, vector<16x128xf32> -> vector<16x128xf32>
    %c1_22 = arith.constant 1 : index
    %c0_23 = arith.constant 0 : index
    %c0_24 = arith.constant 0 : index
    %55 = vector.load %arg5[%c1_22, %c0_23, %c0_24] : memref<2x16x128xf32, #tpu.memory_space<vmem>>, vector<1x16x128xf32>
    %56 = vector.shape_cast %55 : vector<1x16x128xf32> to vector<16x128xf32>
    %57 = vector.shape_cast %54 : vector<16x128xf32> to vector<1x16x128xf32>
    tpu.vector_store %arg5[%c1_22, %c0_23, %c0_24], %57 {strides = array<i32>} : memref<2x16x128xf32, #tpu.memory_space<vmem>>, vector<1x16x128xf32>,
    return
  }
  func.func @transform_0(%arg0: i32) -> (i32, i32) {
    %c0_i32 = arith.constant 0 : i32
    %c0_i32_0 = arith.constant 0 : i32
    %c0_i32_1 = arith.constant 0 : i32
    return %c0_i32, %c0_i32_0 : i32, i32
  }
  func.func @transform_1(%arg0: i32) -> (i32, i32) {
    %c0_i32 = arith.constant 0 : i32
    %c0_i32_0 = arith.constant 0 : i32
    %c0_i32_1 = arith.constant 0 : i32
    return %c0_i32, %c0_i32_0 : i32, i32
  }
  func.func @transform_2(%arg0: i32) -> (i32, i32) {
    %c0_i32 = arith.constant 0 : i32
    %c0_i32_0 = arith.constant 0 : i32
    %c0_i32_1 = arith.constant 0 : i32
    return %c0_i32, %c0_i32_0 : i32, i32
  }
  func.func @transform_3(%arg0: i32) -> (i32, i32, i32) {
    %c0_i32 = arith.constant 0 : i32
    %c0_i32_0 = arith.constant 0 : i32
    %c0_i32_1 = arith.constant 0 : i32
    %c0_i32_2 = arith.constant 0 : i32
    return %c0_i32, %c0_i32_0, %c0_i32_1 : i32, i32, i32
  }
  func.func @transform_4(%arg0: i32) -> (i32, i32, i32) {
    %c0_i32 = arith.constant 0 : i32
    %c0_i32_0 = arith.constant 0 : i32
    %c0_i32_1 = arith.constant 0 : i32
    %c0_i32_2 = arith.constant 0 : i32
    return %c0_i32, %c0_i32_0, %c0_i32_1 : i32, i32, i32
  }
}

</mosaic_0001>

<llo_original>
// kernel: tpu_custom_call.1
$region0: #{tpu_custom_call.1}
  #allocation0 [shape = 'u32[]', space=smem, size = 0x4, offset = 0x4, fixed_abs, tag = 'smem constant byte address 0x4 - core index']
  #allocation1 [shape = 'u32[144,128]{1,0:T(1,128)}', space=vmem, size = 0x12000, scoped, tag = 'internal scratch']
  %s0 = inlined_call_operand.vmem [shape: f32[32,9], index: 0, kind: input, shape index: {}]
  %s1 = inlined_call_operand.vmem [shape: f32[32,9], index: 1, kind: input, shape index: {}]
  %s2 = inlined_call_operand.vmem [shape: f32[32,9], index: 2, kind: input, shape index: {}]
  %s3 = inlined_call_operand.vmem [shape: f32[2,26,128], index: 3, kind: input, shape index: {}]
  %s4 = inlined_call_operand.hbm [shape: f32[2,16,128], index: 4, kind: output, shape index: {}]
  %s5 = sld [smem:[#allocation0]]
  $region26: #{tpu_custom_call.1} parent=0
    _
  %s7 = ssub.s32 1, %s5
  %s8 = scalar_select 0, %s7, %s5
  $region1: #{tpu_custom_call.1} parent=0
    #allocation2 [shape = 'u8[16384]{0}', space=vmem, size = 0x4000, scoped, tag = 'output window, operand 0, single buffered']
    #allocation3 [shape = 's32[1]{0}', space=sflag, size = 0x4, scoped, tag = 'scoped memory for tpu_custom_call.1']
    %9 = vsyncpa [#allocation3], 0
    // Predicated region
    $region2: #{tpu_custom_call.1} parent=1 // pred_check
      _
    $region3: #{tpu_custom_call.1} parent=1 // pred_check_branch
      %11 = sbr.rel (0) target = $region5
    $region4: #{tpu_custom_call.1} parent=1 // pred_region
      _
    $region5: #{tpu_custom_call.1} parent=1 // pred_fallthru
      _
    // Predicated region
    $region6: #{tpu_custom_call.1} parent=1 // pred_check
      _
    $region7: #{tpu_custom_call.1} parent=1 // pred_check_branch
      %13 = sbr.rel (0) target = $region9
    $region8: #{tpu_custom_call.1} parent=1 // pred_region
      _
    $region9: #{tpu_custom_call.1} parent=1 // pred_fallthru
      _
    // Predicated region
    $region10: #{tpu_custom_call.1} parent=1 // pred_check
      _
    $region11: #{tpu_custom_call.1} parent=1 // pred_check_branch
      %15 = sbr.rel (0) target = $region13
    $region12: #{tpu_custom_call.1} parent=1 // pred_region
      _
    $region13: #{tpu_custom_call.1} parent=1 // pred_fallthru
      _
    // Predicated region
    $region14: #{tpu_custom_call.1} parent=1 // pred_check
      _
    $region15: #{tpu_custom_call.1} parent=1 // pred_check_branch
      %17 = sbr.rel (0) target = $region17
    $region16: #{tpu_custom_call.1} parent=1 // pred_region
      _
    $region17: #{tpu_custom_call.1} parent=1 // pred_fallthru
      _
    %v18 = vld [vmem:[%s0] sm:$0xff]
    %v19 = vld [vmem:[%s0 + $0x8] sm:$0xff]
    %v20 = vld [vmem:[%s0 + $0x10] sm:$0xff]
    %v21 = vld [vmem:[%s0 + $0x18] sm:$0xff]
    %vm22 = vcmask 72704
    %v23 = vsel %vm22, %v18, -inf
    %24 = vmax.xlane.f32.xlu0 %v23
    %v25 = vpop.xlane.xlu0 %24
    %v26 = vsel %vm22, %v19, -inf
    %27 = vmax.xlane.f32.xlu0 %v26
    %v28 = vpop.xlane.xlu0 %27
    %v29 = vsel %vm22, %v20, -inf
    %30 = vmax.xlane.f32.xlu0 %v29
    %v31 = vpop.xlane.xlu0 %30
    %v32 = vsel %vm22, %v21, -inf
    %33 = vmax.xlane.f32.xlu0 %v32
    %v34 = vpop.xlane.xlu0 %33
    %v35 = vsub.f32 %v18, %v25
    %v36 = vsub.f32 %v19, %v28
    %v37 = vsub.f32 %v20, %v31
    %v38 = vsub.f32 %v21, %v34
    %v39 = vmul.f32 %v35, 1.442695
    %v40 = vpow.pop %v39
    %v41 = vmul.f32 %v36, 1.442695
    %v42 = vpow.pop %v41
    %v43 = vmul.f32 %v37, 1.442695
    %v44 = vpow.pop %v43
    %v45 = vmul.f32 %v38, 1.442695
    %v46 = vpow.pop %v45
    %v47 = vsel %vm22, %v40, 0.0
    %48 = vadd.xlane.f32.xlu0 %v47
    %v49 = vpop.xlane.xlu0 %48
    %v50 = vsel %vm22, %v42, 0.0
    %51 = vadd.xlane.f32.xlu0 %v50
    %v52 = vpop.xlane.xlu0 %51
    %v53 = vsel %vm22, %v44, 0.0
    %54 = vadd.xlane.f32.xlu0 %v53
    %v55 = vpop.xlane.xlu0 %54
    %v56 = vsel %vm22, %v46, 0.0
    %57 = vadd.xlane.f32.xlu0 %v56
    %v58 = vpop.xlane.xlu0 %57
    %v59 = vrcp.pop %v49
    %v60 = vrcp.pop %v52
    %v61 = vrcp.pop %v55
    %v62 = vrcp.pop %v58
    %v63 = vmul.f32 %v40, %v59
    %v64 = vmul.f32 %v42, %v60
    %v65 = vmul.f32 %v44, %v61
    %v66 = vmul.f32 %v46, %v62
    %v67 = vld [vmem:[%s1] sm:$0xff]
    %v68 = vld [vmem:[%s1 + $0x8] sm:$0xff]
    %v69 = vld [vmem:[%s1 + $0x10] sm:$0xff]
    %v70 = vld [vmem:[%s1 + $0x18] sm:$0xff]
    %v71 = vsel %vm22, %v67, -inf
    %72 = vmax.xlane.f32.xlu0 %v71
    %v73 = vpop.xlane.xlu0 %72
    %v74 = vsel %vm22, %v68, -inf
    %75 = vmax.xlane.f32.xlu0 %v74
    %v76 = vpop.xlane.xlu0 %75
    %v77 = vsel %vm22, %v69, -inf
    %78 = vmax.xlane.f32.xlu0 %v77
    %v79 = vpop.xlane.xlu0 %78
    %v80 = vsel %vm22, %v70, -inf
    %81 = vmax.xlane.f32.xlu0 %v80
    %v82 = vpop.xlane.xlu0 %81
    %v83 = vsub.f32 %v67, %v73
    %v84 = vsub.f32 %v68, %v76
    %v85 = vsub.f32 %v69, %v79
    %v86 = vsub.f32 %v70, %v82
    %v87 = vmul.f32 %v83, 1.442695
    %v88 = vpow.pop %v87
    %v89 = vmul.f32 %v84, 1.442695
    %v90 = vpow.pop %v89
    %v91 = vmul.f32 %v85, 1.442695
    %v92 = vpow.pop %v91
    %v93 = vmul.f32 %v86, 1.442695
    %v94 = vpow.pop %v93
    %v95 = vsel %vm22, %v88, 0.0
    %96 = vadd.xlane.f32.xlu0 %v95
    %v97 = vpop.xlane.xlu0 %96
    %v98 = vsel %vm22, %v90, 0.0
    %99 = vadd.xlane.f32.xlu0 %v98
    %v100 = vpop.xlane.xlu0 %99
    %v101 = vsel %vm22, %v92, 0.0
    %102 = vadd.xlane.f32.xlu0 %v101
    %v103 = vpop.xlane.xlu0 %102
    %v104 = vsel %vm22, %v94, 0.0
    %105 = vadd.xlane.f32.xlu0 %v104
    %v106 = vpop.xlane.xlu0 %105
    %v107 = vrcp.pop %v97
    %v108 = vrcp.pop %v100
    %v109 = vrcp.pop %v103
    %v110 = vrcp.pop %v106
    %v111 = vmul.f32 %v88, %v107
    %v112 = vmul.f32 %v90, %v108
    %v113 = vmul.f32 %v92, %v109
    %v114 = vmul.f32 %v94, %v110
    %v115 = vld [vmem:[%s2] sm:$0xff]
    %v116 = vld [vmem:[%s2 + $0x8] sm:$0xff]
    %v117 = vld [vmem:[%s2 + $0x10] sm:$0xff]
    %v118 = vld [vmem:[%s2 + $0x18] sm:$0xff]
    %v119 = vlaneseq
    %v120 = vand.u32 %v119, 127
    %vm121 = vcmp.eq.s32.totalorder %v120, 0
    %vm122 = vcmp.eq.s32.totalorder %v120, 2
    %vm123 = vmor %vm121, %vm122
    %v124 = vsel %vm123, 0.0, %v115
    %v125 = vsel %vm123, 0.0, %v116
    %v126 = vsel %vm123, 0.0, %v117
    %v127 = vsel %vm123, 0.0, %v118
    %v128 = vsub.f32 0.0, %v124
    %v129 = vsub.f32 0.0, %v125
    %v130 = vsub.f32 0.0, %v126
    %v131 = vsub.f32 0.0, %v127
    %v132 = vmul.f32 %v128, 1.442695
    %v133 = vpow.pop %v132
    %v134 = vmul.f32 %v129, 1.442695
    %v135 = vpow.pop %v134
    %v136 = vmul.f32 %v130, 1.442695
    %v137 = vpow.pop %v136
    %v138 = vmul.f32 %v131, 1.442695
    %v139 = vpow.pop %v138
    %v140 = vadd.f32 %v133, 1.0
    %v141 = vadd.f32 %v135, 1.0
    %v142 = vadd.f32 %v137, 1.0
    %v143 = vadd.f32 %v139, 1.0
    %v144 = vrcp.pop %v140
    %v145 = vrcp.pop %v141
    %v146 = vrcp.pop %v142
    %v147 = vrcp.pop %v143
    %v148 = vsub.f32 1.0, %v144
    %v149 = vsub.f32 1.0, %v145
    %v150 = vsub.f32 1.0, %v146
    %v151 = vsub.f32 1.0, %v147
    %153 = vset.pattern.permute.xlu0 8
    %154 = vperm.xlu0 %153, %v148
    %v155 = vpop.permute.xlu0 %154
    %158 = vset.pattern.permute.xlu0 8
    %159 = vperm.xlu0 %158, %v149
    %v160 = vpop.permute.xlu0 %159
    %163 = vset.pattern.permute.xlu0 8
    %164 = vperm.xlu0 %163, %v150
    %v165 = vpop.permute.xlu0 %164
    %168 = vset.pattern.permute.xlu0 8
    %169 = vperm.xlu0 %168, %v151
    %v170 = vpop.permute.xlu0 %169
    %v172 = vmul.f32 %v144, %v155
    %v173 = vmul.f32 %v145, %v160
    %v174 = vmul.f32 %v146, %v165
    %v175 = vmul.f32 %v147, %v170
    %180 = vrot.lane.b32.xlu0 %v111, 9
    %v181 = vpop.permute.xlu0 %180
    %182 = vrot.lane.b32.xlu0 %v112, 9
    %v183 = vpop.permute.xlu0 %182
    %184 = vrot.lane.b32.xlu0 %v113, 9
    %v185 = vpop.permute.xlu0 %184
    %186 = vrot.lane.b32.xlu0 %v114, 9
    %v187 = vpop.permute.xlu0 %186
    %196 = vrot.lane.b32.xlu0 %v172, 18
    %v197 = vpop.permute.xlu0 %196
    %198 = vrot.lane.b32.xlu0 %v173, 18
    %v199 = vpop.permute.xlu0 %198
    %200 = vrot.lane.b32.xlu0 %v174, 18
    %v201 = vpop.permute.xlu0 %200
    %202 = vrot.lane.b32.xlu0 %v175, 18
    %v203 = vpop.permute.xlu0 %202
    %v208 = vsel %vm22, %v63, %v181
    %v209 = vsel %vm22, %v64, %v183
    %v210 = vsel %vm22, %v65, %v185
    %v211 = vsel %vm22, %v66, %v187
    %vm212 = vcmask 146432
    %v213 = vsel %vm212, %v208, %v197
    %v214 = vsel %vm212, %v209, %v199
    %v215 = vsel %vm212, %v210, %v201
    %v216 = vsel %vm212, %v211, %v203
    %v217 = vld [vmem:[%s3] sm:$0xff]
    %v218 = vld [vmem:[%s3 + $0x8] sm:$0xff]
    %v219 = vld [vmem:[%s3 + $0x10] sm:$0xff]
    %v220 = vld [vmem:[%s3 + $0x18] sm:$0x3]
    %vm221 = vcmask 211968
    %v223 = vsel %vm221, %v213, 0
    %v226 = vsel %vm221, %v214, 0
    %vm228 = vcmask 1041408
    %v230 = vsel %vm228, %v220, 0
    %232 = vmatprep.subr.mxu0 0.0
    %233 = vmatpush1.msra.mxu0 0.0
    %234 = vmatprep.subr.mxu0 0.0
    %235 = vmatpush1.msra.mxu0 0.0
    %236 = vmatprep.subr.mxu0 0.0
    %237 = vmatpush1.msra.mxu0 0.0
    %238 = vmatprep.subr.mxu0 0.0
    %239 = vmatpush1.msra.mxu0 0.0
    %240 = vmatprep.subr.mxu0 0.0
    %241 = vmatpush1.msra.mxu0 0.0
    %242 = vmatprep.subr.mxu0 0.0
    %243 = vmatpush1.msra.mxu0 0.0
    %244 = vmatprep.subr.mxu0 0.0
    %245 = vmatpush1.msra.mxu0 0.0
    %246 = vmatprep.subr.mxu0 0.0
    %247 = vmatpush1.msra.mxu0 0.0
    %248 = vmatprep.subr.mxu0 0.0
    %249 = vmatpush1.msra.mxu0 0.0
    %250 = vmatprep.subr.mxu0 0.0
    %251 = vmatpush1.msra.mxu0 0.0
    %252 = vmatprep.subr.mxu0 0.0
    %253 = vmatpush1.msra.mxu0 0.0
    %254 = vmatprep.subr.mxu0 0.0
    %255 = vmatpush1.msra.mxu0 0.0
    %256 = vmatprep.subr.mxu0 0.0
    %257 = vmatpush1.msra.mxu0 %v230
    %258 = vmatprep.subr.mxu0 0.0
    %259 = vmatpush1.msra.mxu0 %v219
    %260 = vmatprep.subr.mxu0 0.0
    %261 = vmatpush1.msra.mxu0 %v218
    %262 = vmatprep.subr.mxu0 0.0
    %263 = vmatpush1.msra.mxu0 %v217
    %264 = vmatprep.subr.mxu0 0.0
    %265 = vmatpush2.msra.mxu0 0.0
    %266 = vmatprep.subr.mxu0 0.0
    %267 = vmatpush2.msra.mxu0 0.0
    %268 = vmatprep.subr.mxu0 0.0
    %269 = vmatpush2.msra.mxu0 0.0
    %270 = vmatprep.subr.mxu0 0.0
    %271 = vmatpush2.msra.mxu0 0.0
    %272 = vmatprep.subr.mxu0 0.0
    %273 = vmatpush2.msra.mxu0 0.0
    %274 = vmatprep.subr.mxu0 0.0
    %275 = vmatpush2.msra.mxu0 0.0
    %276 = vmatprep.subr.mxu0 0.0
    %277 = vmatpush2.msra.mxu0 0.0
    %278 = vmatprep.subr.mxu0 0.0
    %279 = vmatpush2.msra.mxu0 0.0
    %280 = vmatprep.subr.mxu0 0.0
    %281 = vmatpush2.msra.mxu0 0.0
    %282 = vmatprep.subr.mxu0 0.0
    %283 = vmatpush2.msra.mxu0 0.0
    %284 = vmatprep.subr.mxu0 0.0
    %285 = vmatpush2.msra.mxu0 0.0
    %286 = vmatprep.subr.mxu0 0.0
    %287 = vmatpush2.msra.mxu0 0.0
    %288 = vmatprep.subr.mxu0 0.0
    %289 = vmatpush2.msra.mxu0 0.0
    %290 = vmatprep.subr.mxu0 0.0
    %291 = vmatpush2.msra.mxu0 0.0
    %292 = vmatprep.subr.mxu0 0.0
    %293 = vmatpush2.msra.mxu0 0.0
    %294 = vmatprep.subr.mxu0 0.0
    %295 = vmatpush2.msra.mxu0 0.0
    %296 = vmatprep.mubr.f32.mxu0 0.0
    %297 = vmatmul.mubr.f32.gmra.mxu0 %v223
    %v298 = vpop.f32.mrf.mxu0
    %v299 = vadd.f32 0.0, %v298
    %v300 = vpop.f32.mrf.mxu0
    %301 = vmatprep.mubr.f32.mxu0 0.0
    %302 = vmatmul.mubr.f32.gmra.mxu0 %v226
    %v303 = vpop.f32.mrf.mxu0
    %v304 = vadd.f32 0.0, %v303
    %v305 = vpop.f32.mrf.mxu0
    %306 = vdwg.mxu0
    %307 = vst [vmem:[#allocation2] sm:$0xff] %v299
    %308 = vst [vmem:[#allocation2 + $0x8] sm:$0xff] %v304
    %s309 = scalar_lea.vmem %s3, 32
    %v310 = vld [vmem:[%s309] sm:$0xff]
    %v311 = vld [vmem:[%s309 + $0x8] sm:$0xff]
    %v312 = vld [vmem:[%s309 + $0x10] sm:$0xff]
    %v313 = vld [vmem:[%s309 + $0x18] sm:$0x3]
    %v315 = vsel %vm221, %v215, 0
    %v318 = vsel %vm221, %v216, 0
    %v321 = vsel %vm228, %v313, 0
    %323 = vmatprep.subr.mxu0 0.0
    %324 = vmatpush1.msra.mxu0 0.0
    %325 = vmatprep.subr.mxu0 0.0
    %326 = vmatpush1.msra.mxu0 0.0
    %327 = vmatprep.subr.mxu0 0.0
    %328 = vmatpush1.msra.mxu0 0.0
    %329 = vmatprep.subr.mxu0 0.0
    %330 = vmatpush1.msra.mxu0 0.0
    %331 = vmatprep.subr.mxu0 0.0
    %332 = vmatpush1.msra.mxu0 0.0
    %333 = vmatprep.subr.mxu0 0.0
    %334 = vmatpush1.msra.mxu0 0.0
    %335 = vmatprep.subr.mxu0 0.0
    %336 = vmatpush1.msra.mxu0 0.0
    %337 = vmatprep.subr.mxu0 0.0
    %338 = vmatpush1.msra.mxu0 0.0
    %339 = vmatprep.subr.mxu0 0.0
    %340 = vmatpush1.msra.mxu0 0.0
    %341 = vmatprep.subr.mxu0 0.0
    %342 = vmatpush1.msra.mxu0 0.0
    %343 = vmatprep.subr.mxu0 0.0
    %344 = vmatpush1.msra.mxu0 0.0
    %345 = vmatprep.subr.mxu0 0.0
    %346 = vmatpush1.msra.mxu0 0.0
    %347 = vmatprep.subr.mxu0 0.0
    %348 = vmatpush1.msra.mxu0 %v321
    %349 = vmatprep.subr.mxu0 0.0
    %350 = vmatpush1.msra.mxu0 %v312
    %351 = vmatprep.subr.mxu0 0.0
    %352 = vmatpush1.msra.mxu0 %v311
    %353 = vmatprep.subr.mxu0 0.0
    %354 = vmatpush1.msra.mxu0 %v310
    %355 = vmatprep.subr.mxu0 0.0
    %356 = vmatpush2.msra.mxu0 0.0
    %357 = vmatprep.subr.mxu0 0.0
    %358 = vmatpush2.msra.mxu0 0.0
    %359 = vmatprep.subr.mxu0 0.0
    %360 = vmatpush2.msra.mxu0 0.0
    %361 = vmatprep.subr.mxu0 0.0
    %362 = vmatpush2.msra.mxu0 0.0
    %363 = vmatprep.subr.mxu0 0.0
    %364 = vmatpush2.msra.mxu0 0.0
    %365 = vmatprep.subr.mxu0 0.0
    %366 = vmatpush2.msra.mxu0 0.0
    %367 = vmatprep.subr.mxu0 0.0
    %368 = vmatpush2.msra.mxu0 0.0
    %369 = vmatprep.subr.mxu0 0.0
    %370 = vmatpush2.msra.mxu0 0.0
    %371 = vmatprep.subr.mxu0 0.0
    %372 = vmatpush2.msra.mxu0 0.0
    %373 = vmatprep.subr.mxu0 0.0
    %374 = vmatpush2.msra.mxu0 0.0
    %375 = vmatprep.subr.mxu0 0.0
    %376 = vmatpush2.msra.mxu0 0.0
    %377 = vmatprep.subr.mxu0 0.0
    %378 = vmatpush2.msra.mxu0 0.0
    %379 = vmatprep.subr.mxu0 0.0
    %380 = vmatpush2.msra.mxu0 0.0
    %381 = vmatprep.subr.mxu0 0.0
    %382 = vmatpush2.msra.mxu0 0.0
    %383 = vmatprep.subr.mxu0 0.0
    %384 = vmatpush2.msra.mxu0 0.0
    %385 = vmatprep.subr.mxu0 0.0
    %386 = vmatpush2.msra.mxu0 0.0
    %387 = vmatprep.mubr.f32.mxu0 0.0
    %388 = vmatmul.mubr.f32.gmra.mxu0 %v315
    %v389 = vpop.f32.mrf.mxu0
    %v390 = vadd.f32 0.0, %v389
    %v391 = vpop.f32.mrf.mxu0
    %392 = vmatprep.mubr.f32.mxu0 0.0
    %393 = vmatmul.mubr.f32.gmra.mxu0 %v318
    %v394 = vpop.f32.mrf.mxu0
    %v395 = vadd.f32 0.0, %v394
    %v396 = vpop.f32.mrf.mxu0
    %397 = vdwg.mxu0
    %s398 = scalar_lea.vmem [#allocation2], 16
    %399 = vst [vmem:[%s398] sm:$0xff] %v390
    %400 = vst [vmem:[%s398 + $0x8] sm:$0xff] %v395
    // Predicated region
    $region18: #{tpu_custom_call.1} parent=1 // pred_check
      _
    $region19: #{tpu_custom_call.1} parent=1 // pred_check_branch
      %402 = sbr.rel (0) target = $region21
    $region20: #{tpu_custom_call.1} parent=1 // pred_region
      %s404 = ssub.s32 512, 512
      %405 = vsyncadd [#allocation3], %s404
      %s406 = sshll.u32 [#allocation2], 4
      %s407 = int_to_ptr.vmem [resolvable:$true] %s406
      %412 = dma.vmem_to_hbm [thread:$0]  %s407, 512, %s4, [#allocation3], 128, 128, 8
    $region21: #{tpu_custom_call.1} parent=1 // pred_fallthru
      _
    // Predicated region
    $region22: #{tpu_custom_call.1} parent=1 // pred_check
      _
    $region23: #{tpu_custom_call.1} parent=1 // pred_check_branch
      %414 = sbr.rel (0) target = $region25
    $region24: #{tpu_custom_call.1} parent=1 // pred_region
      %415 = dma.done [#allocation3], 512
    $region25: #{tpu_custom_call.1} parent=1 // pred_fallthru
      _
    %416 = vsyncpa [#allocation3], 1

</llo_original>
